<compile_context>
chip_gen: v5e
topology: v5e:2x2
jax: 0.10.0
libtpu: 0.0.40
codegen_flags: <defaults>
</compile_context>

<pallas_src>
import functools

import jax
import jax.numpy as jnp
from jax.experimental import pallas as pl
from jax.experimental.pallas import tpu as pltpu


# --------------------------------- kernel ------------------------------------
def _rope_kernel(x_ref, cos_ref, sin_ref, o_ref):
    """out[..., j] = x[j]*cos[j] + partner[j]*sin_signed[j]

    partner[j]    = x[j+1] for even j, x[j-1] for odd j (formed via two rolls
                    and one lane-parity select; wrap-around lanes never selected)
    sin_signed[j] = -sin(pair) for even j, +sin(pair) for odd j (baked in table)
    """
    x = x_ref[...].astype(jnp.float32)            # (TS, B, D)
    d = x.shape[-1]
    nxt = pltpu.roll(x, shift=d - 1, axis=2)      # nxt[..., j] = x[..., (j+1) % d]
    prv = pltpu.roll(x, shift=1, axis=2)          # prv[..., j] = x[..., (j-1) % d]
    lane = jax.lax.broadcasted_iota(jnp.int32, x.shape, 2)
    partner = jnp.where((lane & 1) == 0, nxt, prv)
    cos = cos_ref[...][:, None, :]                # (TS, 1, D) -> broadcast over batch
    sin = sin_ref[...][:, None, :]
    o_ref[...] = (x * cos + partner * sin).astype(o_ref.dtype)


# ----------------------------- table construction -----------------------------
@functools.lru_cache(maxsize=16)
def _rope_tables(seq_len, d_model):
    """(S, D) cos table and sign-baked sin table, built once per (S, D)."""
    inv_freq = 1.0 / (10000.0 ** (jnp.arange(0, d_model, 2, dtype=jnp.float32)
                                  / d_model))                       # (D/2,)
    ang = jnp.arange(seq_len, dtype=jnp.float32)[:, None] * inv_freq[None, :]
    cos = jnp.repeat(jnp.cos(ang), 2, axis=-1)                      # (S, D)
    sin = jnp.repeat(jnp.sin(ang), 2, axis=-1)                      # (S, D)
    sign = jnp.where((jnp.arange(d_model) % 2) == 0, -1.0, 1.0).astype(jnp.float32)
    return cos, sin * sign


# ------------------------------- tile selection --------------------------------
def _pick_seq_tile(S, B, D, x_itemsize, vmem_budget_bytes=12 << 20):
    """Seq-tile from a double-buffered VMEM byte budget.

    Streams per seq row: x in + out (x dtype, B rows each) + cos + signed-sin
    tables (f32).  Budget (12 MiB) stays under every generation's scoped VMEM
    default (v5e 16 / v6e 32 / v7x 32 MiB) and v7x's 64 MiB physical VMEM.
    """
    per_row = 2 * (2 * B * x_itemsize + 2 * 4) * D       # x + out + 2 tables, 2 bufs
    ts = int(vmem_budget_bytes // max(per_row, 1))
    ts = max(8, (ts // 8) * 8)                           # (8, 128) sublane rule
    if ts >= S:
        if S >= 16:
            # >=2 grid steps so v7x's two TensorCores can share the "parallel"
            # axis; neutral on single-TC v5e/v6e.
            return max(8, ((S // 2) // 8) * 8)
        return S                                         # full-extent block (legal)
    return ts


# ---------------------------------- wrapper ------------------------------------
def rotary_positional_encoding(x):
    """x: (seq_len, batch, d_model) -> rotary-encoded tensor, same shape/dtype."""
    S, B, D = x.shape
    assert D % 2 == 0, "d_model must be even"

    cos, sin_signed = _rope_tables(S, D)
    TS = _pick_seq_tile(S, B, D, x.dtype.itemsize)
    grid = (pl.cdiv(S, TS),)                             # masked/padded tail tile

    x_spec = pl.BlockSpec((TS, B, D), lambda s: (s, 0, 0))
    tbl_spec = pl.BlockSpec((TS, D), lambda s: (s, 0))

    return pl.pallas_call(
        _rope_kernel,
        out_shape=jax.ShapeDtypeStruct((S, B, D), x.dtype),
        grid_spec=pltpu.PrefetchScalarGridSpec(
            num_scalar_prefetch=0,
            grid=grid,
            in_specs=[x_spec, tbl_spec, tbl_spec],
            out_specs=x_spec),
        compiler_params=pltpu.CompilerParams(
            dimension_semantics=("parallel",),           # independent seq tiles
            vmem_limit_bytes=32 << 20),
    )(x, cos, sin_signed)


# ---------------------------- pure-JAX reference -------------------------------
def _rope_reference(x):
    S, B, D = x.shape
    inv_freq = 1.0 / (10000.0 ** (jnp.arange(0, D, 2, dtype=jnp.float32) / D))
    ang = jnp.arange(S, dtype=jnp.float32)[:, None] * inv_freq[None, :]
    sin = jnp.sin(ang)[:, None, :]
    cos = jnp.cos(ang)[:, None, :]
    x1 = x[..., 0::2]
    x2 = x[..., 1::2]
    out = jnp.zeros_like(x)
    out = out.at[..., 0::2].set(x1 * cos - x2 * sin)
    out = out.at[..., 1::2].set(x1 * sin + x2 * cos)
    return out


if __name__ == "__main__":
    key = jax.random.PRNGKey(0)

    # Small shape matching the module's (seq_len, batch, d_model) layout.
    SEQ_LEN, BATCH, D_MODEL = 8, 2, 128
    x = jax.random.normal(key, (SEQ_LEN, BATCH, D_MODEL), jnp.float32)
    out = jax.block_until_ready(rotary_positional_encoding(x))
    assert out.shape == x.shape and out.dtype == x.dtype
    ref = _rope_reference(x)
    err = float(jnp.max(jnp.abs(out - ref)))
    assert jnp.allclose(out, ref, atol=1e-5, rtol=1e-5), f"max_err={err}"

    # Second check: multi-tile grid with a non-divisible (masked) tail.
    S2, B2, D2 = 40, 3, 256
    x2 = jax.random.normal(jax.random.PRNGKey(1), (S2, B2, D2), jnp.float32)
    out2 = jax.block_until_ready(rotary_positional_encoding(x2))
    ref2 = _rope_reference(x2)
    err2 = float(jnp.max(jnp.abs(out2 - ref2)))
    assert jnp.allclose(out2, ref2, atol=1e-5, rtol=1e-5), f"max_err={err2}"

    print("KERNEL_OK")
</pallas_src>

<mosaic_0001>
module attributes {stable_mosaic.version = 11 : i64} {
  func.func @_rope_kernel(%arg0: i32, %arg1: memref<8x2x128xf32, #tpu.memory_space<vmem>>, %arg2: memref<8x128xf32, #tpu.memory_space<vmem>>, %arg3: memref<8x128xf32, #tpu.memory_space<vmem>>, %arg4: memref<8x2x128xf32, #tpu.memory_space<vmem>>) attributes {dimension_semantics = [#tpu.dimension_semantics<parallel>], iteration_bounds = array<i64: 1>, scalar_prefetch = 0 : i64, scratch_operands = 0 : i64, tpu.core_type = #tpu.core_type<tc>, window_params = [{transform_indices = @transform_0, window_bounds = array<i64: 8, 2, 128>}, {transform_indices = @transform_1, window_bounds = array<i64: 8, 128>}, {transform_indices = @transform_2, window_bounds = array<i64: 8, 128>}, {transform_indices = @transform_3, window_bounds = array<i64: 8, 2, 128>}]} {
    %c0 = arith.constant 0 : index
    %c0_0 = arith.constant 0 : index
    %c0_1 = arith.constant 0 : index
    %0 = vector.load %arg1[%c0, %c0_0, %c0_1] : memref<8x2x128xf32, #tpu.memory_space<vmem>>, vector<8x2x128xf32>
    %c127_i32 = arith.constant 127 : i32
    %1 = tpu.dynamic_rotate %0 by %c127_i32 dim 2 : vector<8x2x128xf32>, i32 -> vector<8x2x128xf32>
    %c1_i32 = arith.constant 1 : i32
    %2 = tpu.dynamic_rotate %0 by %c1_i32 dim 2 : vector<8x2x128xf32>, i32 -> vector<8x2x128xf32>
    %3 = tpu.iota {dimensions = array<i32: 2>} : vector<8x2x128xi32>
    %c1_i32_2 = arith.constant 1 : i32
    %4 = vector.broadcast %c1_i32_2 : i32 to vector<8x2x128xi32>
    %5 = arith.andi %3, %4 : vector<8x2x128xi32>
    %c0_i32 = arith.constant 0 : i32
    %6 = vector.broadcast %c0_i32 : i32 to vector<8x2x128xi32>
    %7 = arith.cmpi eq, %5, %6 : vector<8x2x128xi32>
    %8 = arith.select %7, %1, %2 : vector<8x2x128xi1>, vector<8x2x128xf32>
    %c0_3 = arith.constant 0 : index
    %c0_4 = arith.constant 0 : index
    %9 = vector.load %arg2[%c0_3, %c0_4] : memref<8x128xf32, #tpu.memory_space<vmem>>, vector<8x128xf32>
    %10 = vector.shape_cast %9 : vector<8x128xf32> to vector<8x1x128xf32>
    %c0_5 = arith.constant 0 : index
    %c0_6 = arith.constant 0 : index
    %11 = vector.load %arg3[%c0_5, %c0_6] : memref<8x128xf32, #tpu.memory_space<vmem>>, vector<8x128xf32>
    %12 = vector.shape_cast %11 : vector<8x128xf32> to vector<8x1x128xf32>
    %13 = vector.broadcast %10 : vector<8x1x128xf32> to vector<8x2x128xf32>
    %14 = arith.mulf %0, %13 : vector<8x2x128xf32>
    %15 = vector.broadcast %12 : vector<8x1x128xf32> to vector<8x2x128xf32>
    %16 = arith.mulf %8, %15 : vector<8x2x128xf32>
    %17 = arith.addf %14, %16 : vector<8x2x128xf32>
    %c0_7 = arith.constant 0 : index
    %c0_8 = arith.constant 0 : index
    %c0_9 = arith.constant 0 : index
    %18 = vector.load %arg4[%c0_7, %c0_8, %c0_9] : memref<8x2x128xf32, #tpu.memory_space<vmem>>, vector<8x2x128xf32>
    tpu.vector_store %arg4[%c0_7, %c0_8, %c0_9], %17 {strides = array<i32>} : memref<8x2x128xf32, #tpu.memory_space<vmem>>, vector<8x2x128xf32>,
    return
  }
  func.func @transform_0(%arg0: i32) -> (i32, i32, i32) {
    %c0_i32 = arith.constant 0 : i32
    %c0_i32_0 = arith.constant 0 : i32
    %c0_i32_1 = arith.constant 0 : i32
    return %arg0, %c0_i32, %c0_i32_0 : i32, i32, i32
  }
  func.func @transform_1(%arg0: i32) -> (i32, i32) {
    %c0_i32 = arith.constant 0 : i32
    %c0_i32_0 = arith.constant 0 : i32
    return %arg0, %c0_i32 : i32, i32
  }
  func.func @transform_2(%arg0: i32) -> (i32, i32) {
    %c0_i32 = arith.constant 0 : i32
    %c0_i32_0 = arith.constant 0 : i32
    return %arg0, %c0_i32 : i32, i32
  }
  func.func @transform_3(%arg0: i32) -> (i32, i32, i32) {
    %c0_i32 = arith.constant 0 : i32
    %c0_i32_0 = arith.constant 0 : i32
    %c0_i32_1 = arith.constant 0 : i32
    return %arg0, %c0_i32, %c0_i32_0 : i32, i32, i32
  }
}

</mosaic_0001>

<llo_original>
// kernel: tpu_custom_call.1
$region0: #{tpu_custom_call.1}
  #allocation0 [shape = 'u32[]', space=smem, size = 0x4, offset = 0x4, fixed_abs, tag = 'smem constant byte address 0x4 - core index']
  #allocation1 [shape = 'u32[72,128]{1,0:T(1,128)}', space=vmem, size = 0x9000, scoped, tag = 'internal scratch']
  %s0 = inlined_call_operand.hbm [shape: f32[8,2,128], index: 0, kind: input, shape index: {}]
  %s1 = inlined_call_operand.hbm [shape: f32[8,128], index: 1, kind: input, shape index: {}]
  %s2 = inlined_call_operand.hbm [shape: f32[8,128], index: 2, kind: input, shape index: {}]
  %s3 = inlined_call_operand.hbm [shape: f32[8,2,128], index: 3, kind: output, shape index: {}]
  %s4 = sld [smem:[#allocation0]]
  $region34: #{tpu_custom_call.1} parent=0
    _
  %s6 = ssub.s32 1, %s4
  %s7 = scalar_select 0, %s6, %s4
  $region1: #{tpu_custom_call.1} parent=0
    #allocation2 [shape = 'u8[8192]{0}', space=vmem, size = 0x2000, scoped, tag = 'input window, operand 0, single buffered']
    #allocation3 [shape = 's32[1]{0}', space=sflag, size = 0x4, scoped, tag = 'scoped memory for tpu_custom_call.1']
    #allocation4 [shape = 's32[1]{0}', space=sflag, size = 0x4, scoped, tag = 'scoped memory for tpu_custom_call.1']
    #allocation5 [shape = 'u8[4096]{0}', space=vmem, size = 0x1000, scoped, tag = 'input window, operand 1, single buffered']
    #allocation6 [shape = 's32[1]{0}', space=sflag, size = 0x4, scoped, tag = 'scoped memory for tpu_custom_call.1']
    #allocation7 [shape = 'u8[4096]{0}', space=vmem, size = 0x1000, scoped, tag = 'input window, operand 2, single buffered']
    #allocation8 [shape = 'u8[8192]{0}', space=vmem, size = 0x2000, scoped, tag = 'output window, operand 0, single buffered']
    %8 = vsyncpa [#allocation3], 0
    %9 = vsyncpa [#allocation6], 0
    %10 = vsyncpa [#allocation4], 0
    // Predicated region
    $region2: #{tpu_custom_call.1} parent=1 // pred_check
      _
    $region3: #{tpu_custom_call.1} parent=1 // pred_check_branch
      %12 = sbr.rel (0) target = $region5
    $region4: #{tpu_custom_call.1} parent=1 // pred_region
      %14 = vsyncadd [#allocation3], 0
      %s15 = sshll.u32 %s0, 4
      %s16 = int_to_ptr.hbm [resolvable:$true] %s15
      %s17 = sshll.u32 [#allocation2], 4
      %s18 = int_to_ptr.vmem [resolvable:$true] %s17
      %23 = dma.hbm_to_vmem [thread:$0]  %s16, 256, %s18, [#allocation3], 32, 32, 2
    $region5: #{tpu_custom_call.1} parent=1 // pred_fallthru
      _
    // Predicated region
    $region6: #{tpu_custom_call.1} parent=1 // pred_check
      _
    $region7: #{tpu_custom_call.1} parent=1 // pred_check_branch
      %25 = sbr.rel (0) target = $region9
    $region8: #{tpu_custom_call.1} parent=1 // pred_region
      %27 = vsyncadd [#allocation6], 0
      %s29 = sshll.u32 %s1, 4
      %s30 = int_to_ptr.hbm [resolvable:$true] %s29
      %s31 = sshll.u32 [#allocation5], 4
      %s32 = int_to_ptr.vmem [resolvable:$true] %s31
      %34 = dma.hbm_to_vmem [thread:$0]  %s30, 128, %s32, [#allocation6]
    $region9: #{tpu_custom_call.1} parent=1 // pred_fallthru
      _
    // Predicated region
    $region10: #{tpu_custom_call.1} parent=1 // pred_check
      _
    $region11: #{tpu_custom_call.1} parent=1 // pred_check_branch
      %36 = sbr.rel (0) target = $region13
    $region12: #{tpu_custom_call.1} parent=1 // pred_region
      %38 = vsyncadd [#allocation6], 0
      %s40 = sshll.u32 %s2, 4
      %s41 = int_to_ptr.hbm [resolvable:$true] %s40
      %s42 = sshll.u32 [#allocation7], 4
      %s43 = int_to_ptr.vmem [resolvable:$true] %s42
      %45 = dma.hbm_to_vmem [thread:$0]  %s41, 128, %s43, [#allocation6]
    $region13: #{tpu_custom_call.1} parent=1 // pred_fallthru
      _
    // Predicated region
    $region14: #{tpu_custom_call.1} parent=1 // pred_check
      _
    $region15: #{tpu_custom_call.1} parent=1 // pred_check_branch
      %47 = sbr.rel (0) target = $region17
    $region16: #{tpu_custom_call.1} parent=1 // pred_region
      %49 = dma.done [#allocation3], 256
    $region17: #{tpu_custom_call.1} parent=1 // pred_fallthru
      _
    // Predicated region
    $region18: #{tpu_custom_call.1} parent=1 // pred_check
      _
    $region19: #{tpu_custom_call.1} parent=1 // pred_check_branch
      %51 = sbr.rel (0) target = $region21
    $region20: #{tpu_custom_call.1} parent=1 // pred_region
      %53 = dma.done [#allocation6], 128
    $region21: #{tpu_custom_call.1} parent=1 // pred_fallthru
      _
    // Predicated region
    $region22: #{tpu_custom_call.1} parent=1 // pred_check
      _
    $region23: #{tpu_custom_call.1} parent=1 // pred_check_branch
      %55 = sbr.rel (0) target = $region25
    $region24: #{tpu_custom_call.1} parent=1 // pred_region
      %57 = dma.done [#allocation6], 128
    $region25: #{tpu_custom_call.1} parent=1 // pred_fallthru
      _
    %v58 = vld [vmem:[#allocation2] sm:$0x3]
    %v59 = vld [vmem:[#allocation2 + $0x2] sm:$0x3]
    %v60 = vld [vmem:[#allocation2 + $0x4] sm:$0x3]
    %v61 = vld [vmem:[#allocation2 + $0x6] sm:$0x3]
    %v62 = vld [vmem:[#allocation2 + $0x8] sm:$0x3]
    %v63 = vld [vmem:[#allocation2 + $0xa] sm:$0x3]
    %v64 = vld [vmem:[#allocation2 + $0xc] sm:$0x3]
    %v65 = vld [vmem:[#allocation2 + $0xe] sm:$0x3]
    %66 = vrot.lane.b32.xlu0 %v58, 127
    %v67 = vpop.permute.xlu0 %66
    %68 = vrot.lane.b32.xlu0 %v59, 127
    %v69 = vpop.permute.xlu0 %68
    %70 = vrot.lane.b32.xlu0 %v60, 127
    %v71 = vpop.permute.xlu0 %70
    %72 = vrot.lane.b32.xlu0 %v61, 127
    %v73 = vpop.permute.xlu0 %72
    %74 = vrot.lane.b32.xlu0 %v62, 127
    %v75 = vpop.permute.xlu0 %74
    %76 = vrot.lane.b32.xlu0 %v63, 127
    %v77 = vpop.permute.xlu0 %76
    %78 = vrot.lane.b32.xlu0 %v64, 127
    %v79 = vpop.permute.xlu0 %78
    %80 = vrot.lane.b32.xlu0 %v65, 127
    %v81 = vpop.permute.xlu0 %80
    %82 = vrot.lane.b32.xlu0 %v58, 1
    %v83 = vpop.permute.xlu0 %82
    %84 = vrot.lane.b32.xlu0 %v59, 1
    %v85 = vpop.permute.xlu0 %84
    %86 = vrot.lane.b32.xlu0 %v60, 1
    %v87 = vpop.permute.xlu0 %86
    %88 = vrot.lane.b32.xlu0 %v61, 1
    %v89 = vpop.permute.xlu0 %88
    %90 = vrot.lane.b32.xlu0 %v62, 1
    %v91 = vpop.permute.xlu0 %90
    %92 = vrot.lane.b32.xlu0 %v63, 1
    %v93 = vpop.permute.xlu0 %92
    %94 = vrot.lane.b32.xlu0 %v64, 1
    %v95 = vpop.permute.xlu0 %94
    %96 = vrot.lane.b32.xlu0 %v65, 1
    %v97 = vpop.permute.xlu0 %96
    %v98 = vlaneseq
    %v99 = vand.u32 %v98, 127
    %v100 = vand.u32 %v99, 1
    %vm101 = vcmp.eq.s32.totalorder %v100, 0
    %v102 = vsel %vm101, %v67, %v83
    %v103 = vsel %vm101, %v69, %v85
    %v104 = vsel %vm101, %v71, %v87
    %v105 = vsel %vm101, %v73, %v89
    %v106 = vsel %vm101, %v75, %v91
    %v107 = vsel %vm101, %v77, %v93
    %v108 = vsel %vm101, %v79, %v95
    %v109 = vsel %vm101, %v81, %v97
    %v110 = vld [vmem:[#allocation5] sm:$0xff]
    %v112 = vrot.slane %v110, 1
    %v113 = vrot.slane %v110, 2
    %v114 = vrot.slane %v110, 3
    %v115 = vrot.slane %v110, 4
    %v116 = vrot.slane %v110, 5
    %v117 = vrot.slane %v110, 6
    %v118 = vrot.slane %v110, 7
    %v119 = vld [vmem:[#allocation7] sm:$0xff]
    %v121 = vrot.slane %v119, 1
    %v122 = vrot.slane %v119, 2
    %v123 = vrot.slane %v119, 3
    %v124 = vrot.slane %v119, 4
    %v125 = vrot.slane %v119, 5
    %v126 = vrot.slane %v119, 6
    %v127 = vrot.slane %v119, 7
    %v128 = vperm.slane %v110, 0
    %v129 = vperm.slane %v112, 0
    %v130 = vperm.slane %v113, 0
    %v131 = vperm.slane %v114, 0
    %v132 = vperm.slane %v115, 0
    %v133 = vperm.slane %v116, 0
    %v134 = vperm.slane %v117, 0
    %v135 = vperm.slane %v118, 0
    %v144 = vmul.f32 %v58, %v128
    %v145 = vmul.f32 %v59, %v129
    %v146 = vmul.f32 %v60, %v130
    %v147 = vmul.f32 %v61, %v131
    %v148 = vmul.f32 %v62, %v132
    %v149 = vmul.f32 %v63, %v133
    %v150 = vmul.f32 %v64, %v134
    %v151 = vmul.f32 %v65, %v135
    %v152 = vperm.slane %v119, 0
    %v153 = vperm.slane %v121, 0
    %v154 = vperm.slane %v122, 0
    %v155 = vperm.slane %v123, 0
    %v156 = vperm.slane %v124, 0
    %v157 = vperm.slane %v125, 0
    %v158 = vperm.slane %v126, 0
    %v159 = vperm.slane %v127, 0
    %v168 = vmul.f32 %v102, %v152
    %v169 = vmul.f32 %v103, %v153
    %v170 = vmul.f32 %v104, %v154
    %v171 = vmul.f32 %v105, %v155
    %v172 = vmul.f32 %v106, %v156
    %v173 = vmul.f32 %v107, %v157
    %v174 = vmul.f32 %v108, %v158
    %v175 = vmul.f32 %v109, %v159
    %v176 = vadd.f32 %v144, %v168
    %v177 = vadd.f32 %v145, %v169
    %v178 = vadd.f32 %v146, %v170
    %v179 = vadd.f32 %v147, %v171
    %v180 = vadd.f32 %v148, %v172
    %v181 = vadd.f32 %v149, %v173
    %v182 = vadd.f32 %v150, %v174
    %v183 = vadd.f32 %v151, %v175
    %184 = vst [vmem:[#allocation8] sm:$0x3] %v176
    %185 = vst [vmem:[#allocation8 + $0x2] sm:$0x3] %v177
    %186 = vst [vmem:[#allocation8 + $0x4] sm:$0x3] %v178
    %187 = vst [vmem:[#allocation8 + $0x6] sm:$0x3] %v179
    %188 = vst [vmem:[#allocation8 + $0x8] sm:$0x3] %v180
    %189 = vst [vmem:[#allocation8 + $0xa] sm:$0x3] %v181
    %190 = vst [vmem:[#allocation8 + $0xc] sm:$0x3] %v182
    %191 = vst [vmem:[#allocation8 + $0xe] sm:$0x3] %v183
    // Predicated region
    $region26: #{tpu_custom_call.1} parent=1 // pred_check
      _
    $region27: #{tpu_custom_call.1} parent=1 // pred_check_branch
      %193 = sbr.rel (0) target = $region29
    $region28: #{tpu_custom_call.1} parent=1 // pred_region
      %195 = vsyncadd [#allocation4], 0
      %s196 = sshll.u32 [#allocation8], 4
      %s197 = int_to_ptr.vmem [resolvable:$true] %s196
      %s198 = sshll.u32 %s3, 4
      %s199 = int_to_ptr.hbm [resolvable:$true] %s198
      %204 = dma.vmem_to_hbm [thread:$0]  %s197, 256, %s199, [#allocation4], 32, 32, 2
    $region29: #{tpu_custom_call.1} parent=1 // pred_fallthru
      _
    // Predicated region
    $region30: #{tpu_custom_call.1} parent=1 // pred_check
      _
    $region31: #{tpu_custom_call.1} parent=1 // pred_check_branch
      %206 = sbr.rel (0) target = $region33
    $region32: #{tpu_custom_call.1} parent=1 // pred_region
      %208 = dma.done [#allocation4], 256
    $region33: #{tpu_custom_call.1} parent=1 // pred_fallthru
      _
    %209 = vsyncpa [#allocation3], 1
    %210 = vsyncpa [#allocation6], 1
    %211 = vsyncpa [#allocation4], 1

</llo_original>
